<compile_context>
chip_gen: v6e
topology: v6e:2x2x1
jax: 0.10.0
libtpu: 0.0.40
codegen_flags: <defaults>
</compile_context>

<pallas_src>
import functools

import jax
import jax.numpy as jnp
from jax import lax
from jax.experimental import pallas as pl
from jax.experimental.pallas import tpu as pltpu


def _normalize_scale_kernel(x_ref, w_ref, o_ref):
    # Whole (tile_n, D) block in VMEM. Weight block index is constant across the grid,
    # so the (1, D) weight stays resident and is not re-fetched per step.
    x32 = x_ref[...].astype(jnp.float32)
    w32 = w_ref[...].astype(jnp.float32)                       # (1, D)
    sq_sum = jnp.sum(x32 * x32, axis=1, keepdims=True)         # (tile_n, 1)
    # F.normalize clamps the norm at eps=1e-12; clamping the squared sum at eps^2 is
    # equivalent (sqrt is monotonic) and lets us use a single EUP rsqrt.
    inv = lax.rsqrt(jnp.maximum(sq_sum, 1e-24))                # (tile_n, 1)
    y = x32 * inv * w32                                        # broadcast (tile_n,1),(1,D)
    o_ref[...] = y.astype(o_ref.dtype)


def _pick_tile_n(N: int, D: int) -> int:
    """Pick tile_n so the (tile_n, D) f32 working block is ~2 MiB (multiple of 8)."""
    target_bytes = 2 << 20                        # ~2 MiB / block -> ~8-12 MiB live with
    cand = target_bytes // max(D * 4, 1)          # double-buffered in+out; fits every gen
    cand = max(8, (cand // 8) * 8)
    if cand >= N:
        return N                                  # full-extent block (allowed even if N%8)
    return cand


@functools.partial(jax.jit, static_argnames=("tile_n",))
def normalize_scale(x, weight, *, tile_n=None):
    """x: (N, D), weight: (1, D) -> (N, D). Matches F.normalize(x, p=2, dim=1) * weight."""
    N, D = x.shape
    if tile_n is None:
        tile_n = _pick_tile_n(N, D)

    grid_n = pl.cdiv(N, tile_n)

    # Explicit VMEM budget: 2x double-buffered input block + 2x output block + weight,
    # with headroom for in-kernel f32 temporaries. Capped well under v7x's 64 MiB.
    block_bytes = tile_n * D * 4
    vmem_limit = int(min(48 << 20, max(16 << 20, 8 * block_bytes)))

    return pl.pallas_call(
        _normalize_scale_kernel,
        out_shape=jax.ShapeDtypeStruct((N, D), x.dtype),
        grid_spec=pltpu.PrefetchScalarGridSpec(
            num_scalar_prefetch=0,
            grid=(grid_n,),
            in_specs=[
                pl.BlockSpec((tile_n, D), lambda i: (i, 0)),
                pl.BlockSpec((1, D), lambda i: (0, 0)),
            ],
            out_specs=pl.BlockSpec((tile_n, D), lambda i: (i, 0)),
        ),
        compiler_params=pltpu.CompilerParams(
            dimension_semantics=("parallel",),
            vmem_limit_bytes=vmem_limit,
        ),
    )(x, weight)


if __name__ == "__main__":
    key = jax.random.PRNGKey(0)
    N, D = 8, 32
    init_norm = 20.0

    x = jax.random.normal(key, (N, D), dtype=jnp.float32)
    # nn.Parameter(torch.ones(1, dim) * init_norm)
    weight = jnp.ones((1, D), dtype=jnp.float32) * init_norm

    y = normalize_scale(x, weight)
    y = jax.block_until_ready(y)

    # Pure-JAX reference (matches F.normalize(p=2, dim=1, eps=1e-12) * weight)
    norm = jnp.sqrt(jnp.sum(x * x, axis=1, keepdims=True))
    y_ref = x / jnp.maximum(norm, 1e-12) * weight

    assert y.shape == (N, D)
    assert jnp.allclose(y, y_ref, atol=1e-5, rtol=1e-5)

    # Sanity-check the tiled / ragged path too (N not a multiple of tile_n).
    N2, D2 = 300, 256
    x2 = jax.random.normal(jax.random.PRNGKey(1), (N2, D2), dtype=jnp.float32)
    w2 = jnp.ones((1, D2), dtype=jnp.float32) * init_norm
    y2 = jax.block_until_ready(normalize_scale(x2, w2, tile_n=128))
    n2 = jnp.sqrt(jnp.sum(x2 * x2, axis=1, keepdims=True))
    y2_ref = x2 / jnp.maximum(n2, 1e-12) * w2
    assert jnp.allclose(y2, y2_ref, atol=1e-5, rtol=1e-5)

    print("KERNEL_OK")
</pallas_src>

<mosaic_0001>
module attributes {stable_mosaic.version = 11 : i64} {
  func.func @_normalize_scale_kernel(%arg0: i32, %arg1: memref<8x32xf32, #tpu.memory_space<vmem>>, %arg2: memref<1x32xf32, #tpu.memory_space<vmem>>, %arg3: memref<8x32xf32, #tpu.memory_space<vmem>>) attributes {dimension_semantics = [#tpu.dimension_semantics<parallel>], iteration_bounds = array<i64: 1>, scalar_prefetch = 0 : i64, scratch_operands = 0 : i64, tpu.core_type = #tpu.core_type<tc>, window_params = [{transform_indices = @transform_0, window_bounds = array<i64: 8, 32>}, {pipeline_mode = #tpu.pipeline_mode<synchronous>, transform_indices = @transform_1, window_bounds = array<i64: 1, 32>}, {transform_indices = @transform_2, window_bounds = array<i64: 8, 32>}]} {
    %c0 = arith.constant 0 : index
    %c0_0 = arith.constant 0 : index
    %0 = vector.load %arg1[%c0, %c0_0] : memref<8x32xf32, #tpu.memory_space<vmem>>, vector<8x32xf32>
    %c0_1 = arith.constant 0 : index
    %c0_2 = arith.constant 0 : index
    %1 = vector.load %arg2[%c0_1, %c0_2] : memref<1x32xf32, #tpu.memory_space<vmem>>, vector<1x32xf32>
    %2 = arith.mulf %0, %0 : vector<8x32xf32>
    %cst = arith.constant dense<0.000000e+00> : vector<8xf32>
    %3 = vector.multi_reduction <add>, %2, %cst [1] : vector<8x32xf32> to vector<8xf32>
    %4 = vector.shape_cast %3 : vector<8xf32> to vector<8x1xf32>
    %cst_3 = arith.constant 1.000000e-24 : f32
    %5 = vector.broadcast %cst_3 : f32 to vector<8x1xf32>
    %6 = arith.maximumf %4, %5 : vector<8x1xf32>
    %7 = math.rsqrt %6 : vector<8x1xf32>
    %8 = vector.broadcast %7 : vector<8x1xf32> to vector<8x32xf32>
    %9 = arith.mulf %0, %8 : vector<8x32xf32>
    %10 = vector.broadcast %1 : vector<1x32xf32> to vector<8x32xf32>
    %11 = arith.mulf %9, %10 : vector<8x32xf32>
    %c0_4 = arith.constant 0 : index
    %c0_5 = arith.constant 0 : index
    %12 = vector.load %arg3[%c0_4, %c0_5] : memref<8x32xf32, #tpu.memory_space<vmem>>, vector<8x32xf32>
    tpu.vector_store %arg3[%c0_4, %c0_5], %11 {strides = array<i32>} : memref<8x32xf32, #tpu.memory_space<vmem>>, vector<8x32xf32>,
    return
  }
  func.func @transform_0(%arg0: i32) -> (i32, i32) {
    %c0_i32 = arith.constant 0 : i32
    %c0_i32_0 = arith.constant 0 : i32
    return %arg0, %c0_i32 : i32, i32
  }
  func.func @transform_1(%arg0: i32) -> (i32, i32) {
    %c0_i32 = arith.constant 0 : i32
    %c0_i32_0 = arith.constant 0 : i32
    %c0_i32_1 = arith.constant 0 : i32
    return %c0_i32, %c0_i32_0 : i32, i32
  }
  func.func @transform_2(%arg0: i32) -> (i32, i32) {
    %c0_i32 = arith.constant 0 : i32
    %c0_i32_0 = arith.constant 0 : i32
    return %arg0, %c0_i32 : i32, i32
  }
}

</mosaic_0001>

<llo_original>
// kernel: normalize_scale.1
$region0: #{normalize_scale.1}
  #allocation0 [shape = 'u32[]', space=smem, size = 0x4, offset = 0x4, fixed_abs, tag = 'smem constant byte address 0x4 - core index']
  #allocation1 [shape = 'u32[144,128]{1,0:T(1,128)}', space=vmem, size = 0x12000, scoped, tag = 'internal scratch']
  %s0 = inlined_call_operand.hbm [shape: f32[8,32], index: 0, kind: input, shape index: {}]
  %s1 = inlined_call_operand.vmem [shape: f32[1,32], index: 1, kind: input, shape index: {}]
  %s2 = inlined_call_operand.hbm [shape: f32[8,32], index: 2, kind: output, shape index: {}]
  %s3 = sld [smem:[#allocation0]]
  $region22: #{normalize_scale.1} parent=0
    _
  %s5 = ssub.s32 1, %s3
  %s6 = scalar_select 0, %s5, %s3
  $region1: #{normalize_scale.1} parent=0
    #allocation2 [shape = 'u8[4096]{0}', space=vmem, size = 0x1000, scoped, tag = 'input window, operand 0, single buffered']
    #allocation3 [shape = 's32[1]{0}', space=sflag, size = 0x4, scoped, tag = 'scoped memory for normalize_scale.1']
    #allocation4 [shape = 's32[1]{0}', space=sflag, size = 0x4, scoped, tag = 'scoped memory for normalize_scale.1']
    #allocation5 [shape = 'u8[4096]{0}', space=vmem, size = 0x1000, scoped, tag = 'output window, operand 0, single buffered']
    %7 = vsyncpa [#allocation3], 0
    %8 = vsyncpa [#allocation4], 0
    // Predicated region
    $region2: #{normalize_scale.1} parent=1 // pred_check
      _
    $region3: #{normalize_scale.1} parent=1 // pred_check_branch
      %10 = sbr.rel (0) target = $region5
    $region4: #{normalize_scale.1} parent=1 // pred_region
      %s12 = ssub.s32 128, 128
      %13 = vsyncadd [#allocation3], %s12
      %s15 = sshll.u32 [#allocation2], 4
      %s16 = int_to_ptr.vmem [resolvable:$true] %s15
      %18 = dma.hbm_to_vmem [thread:$0]  %s0, 128, %s16, [#allocation3]
    $region5: #{normalize_scale.1} parent=1 // pred_fallthru
      _
    // Predicated region
    $region6: #{normalize_scale.1} parent=1 // pred_check
      _
    $region7: #{normalize_scale.1} parent=1 // pred_check_branch
      %20 = sbr.rel (0) target = $region9
    $region8: #{normalize_scale.1} parent=1 // pred_region
      _
    $region9: #{normalize_scale.1} parent=1 // pred_fallthru
      _
    // Predicated region
    $region10: #{normalize_scale.1} parent=1 // pred_check
      _
    $region11: #{normalize_scale.1} parent=1 // pred_check_branch
      %22 = sbr.rel (0) target = $region13
    $region12: #{normalize_scale.1} parent=1 // pred_region
      %23 = dma.done [#allocation3], 128
    $region13: #{normalize_scale.1} parent=1 // pred_fallthru
      _
    %v24 = vld [vmem:[#allocation2] sm:$0xff]
    %v25 = vld [vmem:[%s1] sm:$0x1]
    %v26 = vmul.f32 %v24, %v24
    %vm27 = vcmask 261120
    %v28 = vsel %vm27, %v26, 0.0
    %29 = vadd.xlane.f32.xlu0 %v28
    %v30 = vpop.xlane.xlu0 %29
    %v31 = vmax.f32 %v30, 1e-24
    %v32 = vrsqrt.pop %v31
    %v33 = vmul.f32 %v24, %v32
    %v35 = vlaneseq
    %v36 = vshrl.u32 %v35, 7
    %v37 = vsub.s32 0, %v36
    %v38 = vrot.slane %v25, %v37
    %v40 = vmul.f32 %v33, %v38
    %41 = vst.msk [vmem:[#allocation5] sm:$0xff] %vm27, %v40
    // Predicated region
    $region14: #{normalize_scale.1} parent=1 // pred_check
      _
    $region15: #{normalize_scale.1} parent=1 // pred_check_branch
      %43 = sbr.rel (0) target = $region17
    $region16: #{normalize_scale.1} parent=1 // pred_region
      %s45 = ssub.s32 128, 128
      %46 = vsyncadd [#allocation4], %s45
      %s48 = sshll.u32 [#allocation5], 4
      %s49 = int_to_ptr.vmem [resolvable:$true] %s48
      %51 = dma.vmem_to_hbm [thread:$0]  %s49, 128, %s2, [#allocation4]
    $region17: #{normalize_scale.1} parent=1 // pred_fallthru
      _
    // Predicated region
    $region18: #{normalize_scale.1} parent=1 // pred_check
      _
    $region19: #{normalize_scale.1} parent=1 // pred_check_branch
      %53 = sbr.rel (0) target = $region21
    $region20: #{normalize_scale.1} parent=1 // pred_region
      %54 = dma.done [#allocation4], 128
    $region21: #{normalize_scale.1} parent=1 // pred_fallthru
      _
    %55 = vsyncpa [#allocation3], 1
    %56 = vsyncpa [#allocation4], 1

</llo_original>
